<compile_context>
chip_gen: v5e
topology: v5e:2x2
jax: 0.10.0
libtpu: 0.0.40
codegen_flags: <defaults>
</compile_context>

<pallas_src>
import functools

import jax
import jax.numpy as jnp
from jax.experimental import pallas as pl
from jax.experimental.pallas import tpu as pltpu


# --------------------------------------------------------------------------- #
# Kernel
# --------------------------------------------------------------------------- #
def _ae_kernel(x_ref, w1_ref, b1_ref, w2_ref, b2_ref, out_ref):
    # Two MXU matmuls with f32 accumulation; bias-add and tanh stay in f32
    # (correct on v5e which has no bf16 VPU/EUP, and exact for the f32 path).
    x = x_ref[...].astype(w1_ref.dtype)          # keep the bf16 MXU path when weights are bf16
    h = jnp.tanh(
        jnp.dot(x, w1_ref[...], preferred_element_type=jnp.float32) + b1_ref[...]
    )
    y = jnp.tanh(
        jnp.dot(h.astype(w2_ref.dtype), w2_ref[...],
                preferred_element_type=jnp.float32) + b2_ref[...]
    )
    out_ref[...] = y.astype(out_ref.dtype)


# --------------------------------------------------------------------------- #
# Helpers
# --------------------------------------------------------------------------- #
def _round_up(n, m):
    return (n + m - 1) // m * m


def _sublane_multiple(dtype):
    return {4: 8, 2: 16, 1: 32}.get(jnp.dtype(dtype).itemsize, 8)


def _stream_dtype(x_dtype, w_dtype):
    """dtype x / out are streamed in: downcast x to the weight dtype if narrower."""
    if jnp.dtype(w_dtype).itemsize < jnp.dtype(x_dtype).itemsize:
        return jnp.dtype(w_dtype)
    return jnp.dtype(x_dtype)


def _tpu_generation_info():
    """(num_tensorcores, scoped_vmem_default, physical_vmem, max_block) per generation."""
    kind = ""
    try:
        kind = jax.devices()[0].device_kind.lower()
    except Exception:
        pass
    if "v7" in kind or "7x" in kind:
        info = dict(num_cores=2, scoped_default=32 << 20, physical_vmem=64 << 20,
                    max_block=1024)
    elif "v6" in kind:
        info = dict(num_cores=1, scoped_default=32 << 20, physical_vmem=128 << 20,
                    max_block=2048)
    elif "v5" in kind:
        info = dict(num_cores=1, scoped_default=16 << 20, physical_vmem=128 << 20,
                    max_block=2048)
    else:  # unknown generation: be conservative
        info = dict(num_cores=1, scoped_default=16 << 20, physical_vmem=32 << 20,
                    max_block=1024)
    try:  # refine physical VMEM if the query is available
        cap = getattr(pltpu.get_tpu_info(), "vmem_capacity_bytes", None)
        if cap:
            info["physical_vmem"] = int(cap)
    except Exception:
        pass
    return info


# --------------------------------------------------------------------------- #
# One-time parameter preparation (outside the hot path)
# --------------------------------------------------------------------------- #
def prepare_params(w1, b1, w2, b2, *, compute_dtype=None, pad_to=128):
    """Pre-transpose nn.Linear weights to [in, out], make biases 2-D f32, and
    zero-pad BOTH the hidden dim and x_dim to lane-friendly multiples of 128.
    Padding is exact: padded x columns hit zero rows of W1^T, padded hidden
    columns give tanh(0)=0 which hit zero rows of W2^T, padded output columns
    are tanh(0)=0 and sliced off.  Do this ONCE at init, not per forward."""
    emb_dim, x_dim = w1.shape
    emb_pad = _round_up(emb_dim, pad_to)
    x_pad = _round_up(x_dim, pad_to)

    w1_t = jnp.pad(jnp.transpose(w1), ((0, x_pad - x_dim), (0, emb_pad - emb_dim)))
    w2_t = jnp.pad(jnp.transpose(w2), ((0, emb_pad - emb_dim), (0, x_pad - x_dim)))
    b1_2d = jnp.pad(b1.reshape(1, -1).astype(jnp.float32),
                    ((0, 0), (0, emb_pad - emb_dim)))
    b2_2d = jnp.pad(b2.reshape(1, -1).astype(jnp.float32),
                    ((0, 0), (0, x_pad - x_dim)))
    if compute_dtype is not None:  # e.g. jnp.bfloat16 on v6e/v7x for HBM-bound speedup
        w1_t = w1_t.astype(compute_dtype)
        w2_t = w2_t.astype(compute_dtype)
    return w1_t, b1_2d, w2_t, b2_2d


# --------------------------------------------------------------------------- #
# Tile selection (VMEM-aware, generation-aware)
# --------------------------------------------------------------------------- #
def _choose_block_b(B, x_dim_pad, emb_pad, x_itemsize, w_itemsize, sub,
                    *, max_block, vmem_budget, num_cores):
    """Largest sublane-multiple batch tile <= max_block fitting the VMEM budget.
    Only on chips with >=2 TensorCores (v7x) do we force >=2 grid steps so the
    'parallel' batch axis can shard across cores."""
    weights = 2 * x_dim_pad * emb_pad * w_itemsize + (emb_pad + x_dim_pad) * 4

    def fits(b):
        io = b * x_dim_pad * x_itemsize * (3 + 2)     # x (<=3 bufs) + out (2 bufs)
        live = b * (emb_pad + x_dim_pad) * 4          # f32 intermediates
        return weights + io + live <= vmem_budget

    block = min(max_block, _round_up(B, sub))
    block = max(_round_up(block, sub), sub)
    while block > sub and not fits(block):
        block -= sub

    if num_cores >= 2 and B >= 2 * sub:
        steps = _round_up(B, block) // block
        if steps < num_cores:
            block = max(_round_up(-(-B // num_cores), sub), sub)
    return int(block)


def _vmem_limit_bytes(block_b, x_dim_pad, emb_pad, stream_itemsize, w_itemsize,
                      x_buffers, scoped_default, physical_vmem):
    """Explicit scoped-VMEM limit from the actual footprint, clamped to the chip."""
    weights = 2 * x_dim_pad * emb_pad * w_itemsize + (emb_pad + x_dim_pad) * 4
    io = block_b * x_dim_pad * stream_itemsize * (x_buffers + 2)
    live = block_b * (emb_pad + x_dim_pad) * 4
    limit = max(2 * (weights + io + live) + (4 << 20), scoped_default)
    return int(min(limit, physical_vmem - (2 << 20)))


# --------------------------------------------------------------------------- #
# Forward wrapper
# --------------------------------------------------------------------------- #
@functools.partial(jax.jit, static_argnames=("block_b", "x_buffers", "vmem_limit"))
def _autoencoder_pallas(x, w1_t, b1, w2_t, b2, *, block_b, x_buffers, vmem_limit):
    B, x_dim = x.shape
    x_dim_pad, emb_pad = w1_t.shape

    stream_dt = _stream_dtype(x.dtype, w1_t.dtype)
    if x.dtype != stream_dt:
        x = x.astype(stream_dt)                     # halve streamed HBM bytes on bf16 path

    Bp = _round_up(B, block_b)
    if Bp != B or x_dim_pad != x_dim:
        x = jnp.pad(x, ((0, Bp - B), (0, x_dim_pad - x_dim)))

    grid = (Bp // block_b,)

    flops = 4 * Bp * x_dim_pad * emb_pad            # 2 matmuls x 2 flops/MAC
    transcendentals = Bp * (emb_pad + x_dim_pad)    # tanh on h and y
    bytes_accessed = (Bp * x_dim_pad * jnp.dtype(stream_dt).itemsize * 2
                      + 2 * x_dim_pad * emb_pad * jnp.dtype(w1_t.dtype).itemsize
                      + (emb_pad + x_dim_pad) * 4)

    out = pl.pallas_call(
        _ae_kernel,
        out_shape=jax.ShapeDtypeStruct((Bp, x_dim_pad), stream_dt),
        grid_spec=pltpu.PrefetchScalarGridSpec(
            num_scalar_prefetch=0,
            grid=grid,
            in_specs=[
                # streamed batch tile (extra buffering hides exposed DMA latency)
                pl.BlockSpec((block_b, x_dim_pad), lambda i: (i, 0),
                             pipeline_mode=pl.Buffered(x_buffers)),
                # resident weights/biases: constant index -> single-buffered
                pl.BlockSpec((x_dim_pad, emb_pad), lambda i: (0, 0),
                             pipeline_mode=pl.Buffered(1)),
                pl.BlockSpec((1, emb_pad), lambda i: (0, 0),
                             pipeline_mode=pl.Buffered(1)),
                pl.BlockSpec((emb_pad, x_dim_pad), lambda i: (0, 0),
                             pipeline_mode=pl.Buffered(1)),
                pl.BlockSpec((1, x_dim_pad), lambda i: (0, 0),
                             pipeline_mode=pl.Buffered(1)),
            ],
            out_specs=pl.BlockSpec((block_b, x_dim_pad), lambda i: (i, 0)),
        ),
        compiler_params=pltpu.CompilerParams(
            dimension_semantics=("parallel",),
            vmem_limit_bytes=vmem_limit,
        ),
        cost_estimate=pl.CostEstimate(
            flops=int(flops),
            transcendentals=int(transcendentals),
            bytes_accessed=int(bytes_accessed),
        ),
    )(x, w1_t, b1, w2_t, b2)

    if Bp != B or x_dim_pad != x_dim:
        out = out[:B, :x_dim]
    return out


def autoencoder_forward(x, w1_t, b1_2d, w2_t, b2_2d, *, block_b=None, max_block=None):
    """x: [B, x_dim] (unpadded); params from prepare_params()."""
    B, x_dim = x.shape
    x_dim_pad, emb_pad = w1_t.shape
    info = _tpu_generation_info()
    if max_block is None:
        max_block = info["max_block"]

    stream_dt = _stream_dtype(x.dtype, w1_t.dtype)
    sub = _sublane_multiple(stream_dt)
    w_itemsize = jnp.dtype(w1_t.dtype).itemsize
    x_itemsize = jnp.dtype(stream_dt).itemsize

    if block_b is None:
        block_b = _choose_block_b(
            B, x_dim_pad, emb_pad, x_itemsize, w_itemsize, sub,
            max_block=max_block,
            vmem_budget=max(info["scoped_default"], info["physical_vmem"] // 2),
            num_cores=info["num_cores"])
    block_b = int(block_b)

    steps = _round_up(B, block_b) // block_b
    x_buffers = 3 if steps >= 3 else 2

    vmem_limit = _vmem_limit_bytes(
        block_b, x_dim_pad, emb_pad, x_itemsize, w_itemsize, x_buffers,
        info["scoped_default"], info["physical_vmem"])

    return _autoencoder_pallas(x, w1_t, b1_2d, w2_t, b2_2d,
                               block_b=block_b, x_buffers=x_buffers,
                               vmem_limit=vmem_limit)


# --------------------------------------------------------------------------- #
# Init + reference
# --------------------------------------------------------------------------- #
def init_autoencoder_params(key, x_dim, emb_dim, dtype=jnp.float32):
    """Deterministic init mirroring nn.Linear default (uniform +-1/sqrt(fan_in))."""
    k1, k2, k3, k4 = jax.random.split(key, 4)
    lim1 = 1.0 / jnp.sqrt(x_dim)
    lim2 = 1.0 / jnp.sqrt(emb_dim)
    w1 = jax.random.uniform(k1, (emb_dim, x_dim), dtype, -lim1, lim1)  # fc1.weight
    b1 = jax.random.uniform(k2, (emb_dim,),       dtype, -lim1, lim1)  # fc1.bias
    w2 = jax.random.uniform(k3, (x_dim, emb_dim), dtype, -lim2, lim2)  # fc2.weight
    b2 = jax.random.uniform(k4, (x_dim,),         dtype, -lim2, lim2)  # fc2.bias
    return w1, b1, w2, b2


def _reference_forward(x, w1, b1, w2, b2):
    h = jnp.tanh(x @ w1.T + b1)
    return jnp.tanh(h @ w2.T + b2)


# TODO(synk): get_embedding / forward_context are not implemented (forward only, per spec).

if __name__ == "__main__":
    # ---- f32 path (exact vs reference) ------------------------------------ #
    batch, x_dim, emb_dim = 8, 128, 32
    key = jax.random.PRNGKey(0)
    kx, kp = jax.random.split(key)
    x = jax.random.normal(kx, (batch, x_dim), jnp.float32)
    w1, b1, w2, b2 = init_autoencoder_params(kp, x_dim, emb_dim)

    w1_t, b1_2d, w2_t, b2_2d = prepare_params(w1, b1, w2, b2)
    out = jax.block_until_ready(autoencoder_forward(x, w1_t, b1_2d, w2_t, b2_2d))
    ref = _reference_forward(x, w1, b1, w2, b2)
    assert out.shape == (batch, x_dim)
    assert jnp.allclose(out, ref, atol=1e-5, rtol=1e-5), "f32 mismatch vs reference"

    # ---- non-aligned dims path (exercises x_dim / emb / batch zero-padding) #
    batch2, x_dim2, emb2 = 6, 96, 20
    kx2, kp2 = jax.random.split(jax.random.PRNGKey(1))
    x2 = jax.random.normal(kx2, (batch2, x_dim2), jnp.float32)
    p2 = init_autoencoder_params(kp2, x_dim2, emb2)
    out2 = jax.block_until_ready(autoencoder_forward(x2, *prepare_params(*p2)))
    ref2 = _reference_forward(x2, *p2)
    assert out2.shape == (batch2, x_dim2)
    assert jnp.allclose(out2, ref2, atol=1e-5, rtol=1e-5), "padded-dim mismatch vs reference"

    # ---- bf16 streaming path (perf mode for v6e/v7x; f32 accumulate) ------ #
    w1b, b1b, w2b, b2b = prepare_params(w1, b1, w2, b2, compute_dtype=jnp.bfloat16)
    out_bf = jax.block_until_ready(autoencoder_forward(x, w1b, b1b, w2b, b2b))
    assert out_bf.shape == (batch, x_dim)
    assert jnp.allclose(out_bf.astype(jnp.float32), ref, atol=5e-2, rtol=5e-2), \
        "bf16 mismatch vs reference"

    print("KERNEL_OK")
</pallas_src>

<mosaic_0001>
module attributes {stable_mosaic.version = 11 : i64} {
  func.func @_ae_kernel(%arg0: i32, %arg1: memref<8x128xf32, #tpu.memory_space<vmem>>, %arg2: memref<128x128xf32, #tpu.memory_space<vmem>>, %arg3: memref<1x128xf32, #tpu.memory_space<vmem>>, %arg4: memref<128x128xf32, #tpu.memory_space<vmem>>, %arg5: memref<1x128xf32, #tpu.memory_space<vmem>>, %arg6: memref<8x128xf32, #tpu.memory_space<vmem>>) attributes {dimension_semantics = [#tpu.dimension_semantics<parallel>], iteration_bounds = array<i64: 1>, scalar_prefetch = 0 : i64, scratch_operands = 0 : i64, tpu.core_type = #tpu.core_type<tc>, window_params = [{pipeline_mode = #tpu.pipeline_mode<double_buffered>, transform_indices = @transform_0, window_bounds = array<i64: 8, 128>}, {pipeline_mode = #tpu.pipeline_mode<synchronous>, transform_indices = @transform_1, window_bounds = array<i64: 128, 128>}, {pipeline_mode = #tpu.pipeline_mode<synchronous>, transform_indices = @transform_2, window_bounds = array<i64: 1, 128>}, {pipeline_mode = #tpu.pipeline_mode<synchronous>, transform_indices = @transform_3, window_bounds = array<i64: 128, 128>}, {pipeline_mode = #tpu.pipeline_mode<synchronous>, transform_indices = @transform_4, window_bounds = array<i64: 1, 128>}, {transform_indices = @transform_5, window_bounds = array<i64: 8, 128>}]} {
    %c0 = arith.constant 0 : index
    %c0_0 = arith.constant 0 : index
    %0 = vector.load %arg1[%c0, %c0_0] : memref<8x128xf32, #tpu.memory_space<vmem>>, vector<8x128xf32>
    %c0_1 = arith.constant 0 : index
    %c0_2 = arith.constant 0 : index
    %1 = vector.load %arg2[%c0_1, %c0_2] : memref<128x128xf32, #tpu.memory_space<vmem>>, vector<128x128xf32>
    %cst = arith.constant dense<0.000000e+00> : vector<8x128xf32>
    %2 = tpu.matmul %0, %1, %cst {dimension_numbers = #tpu.dot_dimension_numbers<[1], [0], [0], [1], [0, 0, 1, 1], [], []>} : vector<8x128xf32>, vector<128x128xf32>, vector<8x128xf32> -> vector<8x128xf32>
    %c0_3 = arith.constant 0 : index
    %c0_4 = arith.constant 0 : index
    %3 = vector.load %arg3[%c0_3, %c0_4] : memref<1x128xf32, #tpu.memory_space<vmem>>, vector<1x128xf32>
    %4 = vector.broadcast %3 : vector<1x128xf32> to vector<8x128xf32>
    %5 = arith.addf %2, %4 : vector<8x128xf32>
    %6 = math.tanh %5 : vector<8x128xf32>
    %c0_5 = arith.constant 0 : index
    %c0_6 = arith.constant 0 : index
    %7 = vector.load %arg4[%c0_5, %c0_6] : memref<128x128xf32, #tpu.memory_space<vmem>>, vector<128x128xf32>
    %cst_7 = arith.constant dense<0.000000e+00> : vector<8x128xf32>
    %8 = tpu.matmul %6, %7, %cst_7 {dimension_numbers = #tpu.dot_dimension_numbers<[1], [0], [0], [1], [0, 0, 1, 1], [], []>} : vector<8x128xf32>, vector<128x128xf32>, vector<8x128xf32> -> vector<8x128xf32>
    %c0_8 = arith.constant 0 : index
    %c0_9 = arith.constant 0 : index
    %9 = vector.load %arg5[%c0_8, %c0_9] : memref<1x128xf32, #tpu.memory_space<vmem>>, vector<1x128xf32>
    %10 = vector.broadcast %9 : vector<1x128xf32> to vector<8x128xf32>
    %11 = arith.addf %8, %10 : vector<8x128xf32>
    %12 = math.tanh %11 : vector<8x128xf32>
    %c0_10 = arith.constant 0 : index
    %c0_11 = arith.constant 0 : index
    %13 = vector.load %arg6[%c0_10, %c0_11] : memref<8x128xf32, #tpu.memory_space<vmem>>, vector<8x128xf32>
    tpu.vector_store %arg6[%c0_10, %c0_11], %12 {strides = array<i32>} : memref<8x128xf32, #tpu.memory_space<vmem>>, vector<8x128xf32>,
    return
  }
  func.func @transform_0(%arg0: i32) -> (i32, i32) {
    %c0_i32 = arith.constant 0 : i32
    %c0_i32_0 = arith.constant 0 : i32
    return %arg0, %c0_i32 : i32, i32
  }
  func.func @transform_1(%arg0: i32) -> (i32, i32) {
    %c0_i32 = arith.constant 0 : i32
    %c0_i32_0 = arith.constant 0 : i32
    %c0_i32_1 = arith.constant 0 : i32
    return %c0_i32, %c0_i32_0 : i32, i32
  }
  func.func @transform_2(%arg0: i32) -> (i32, i32) {
    %c0_i32 = arith.constant 0 : i32
    %c0_i32_0 = arith.constant 0 : i32
    %c0_i32_1 = arith.constant 0 : i32
    return %c0_i32, %c0_i32_0 : i32, i32
  }
  func.func @transform_3(%arg0: i32) -> (i32, i32) {
    %c0_i32 = arith.constant 0 : i32
    %c0_i32_0 = arith.constant 0 : i32
    %c0_i32_1 = arith.constant 0 : i32
    return %c0_i32, %c0_i32_0 : i32, i32
  }
  func.func @transform_4(%arg0: i32) -> (i32, i32) {
    %c0_i32 = arith.constant 0 : i32
    %c0_i32_0 = arith.constant 0 : i32
    %c0_i32_1 = arith.constant 0 : i32
    return %c0_i32, %c0_i32_0 : i32, i32
  }
  func.func @transform_5(%arg0: i32) -> (i32, i32) {
    %c0_i32 = arith.constant 0 : i32
    %c0_i32_0 = arith.constant 0 : i32
    return %arg0, %c0_i32 : i32, i32
  }
}

</mosaic_0001>

<llo_original>
// kernel: _autoencoder_pallas.1
$region0: #{_autoencoder_pallas.1}
  #allocation0 [shape = 'u32[]', space=smem, size = 0x4, offset = 0x4, fixed_abs, tag = 'smem constant byte address 0x4 - core index']
  #allocation1 [shape = 'u32[72,128]{1,0:T(1,128)}', space=vmem, size = 0x9000, scoped, tag = 'internal scratch']
  %s0 = inlined_call_operand.hbm [shape: f32[8,128], index: 0, kind: input, shape index: {}]
  %s1 = inlined_call_operand.hbm [shape: f32[128,128], index: 1, kind: input, shape index: {}]
  %s2 = inlined_call_operand.vmem [shape: f32[1,128], index: 2, kind: input, shape index: {}]
  %s3 = inlined_call_operand.hbm [shape: f32[128,128], index: 3, kind: input, shape index: {}]
  %s4 = inlined_call_operand.vmem [shape: f32[1,128], index: 4, kind: input, shape index: {}]
  %s5 = inlined_call_operand.hbm [shape: f32[8,128], index: 5, kind: output, shape index: {}]
  %s6 = sld [smem:[#allocation0]]
  $region42: #{_autoencoder_pallas.1} parent=0
    _
  %s8 = ssub.s32 1, %s6
  %s9 = scalar_select 0, %s8, %s6
  $region1: #{_autoencoder_pallas.1} parent=0
    #allocation2 [shape = 'u8[4096]{0}', space=vmem, size = 0x1000, scoped, tag = 'input window, operand 0, single buffered']
    #allocation3 [shape = 's32[1]{0}', space=sflag, size = 0x4, scoped, tag = 'scoped memory for _autoencoder_pallas.1']
    #allocation4 [shape = 's32[1]{0}', space=sflag, size = 0x4, scoped, tag = 'scoped memory for _autoencoder_pallas.1']
    #allocation5 [shape = 'u8[65536]{0}', space=vmem, size = 0x10000, scoped, tag = 'input window, operand 1, single buffered']
    #allocation6 [shape = 's32[1]{0}', space=sflag, size = 0x4, scoped, tag = 'scoped memory for _autoencoder_pallas.1']
    #allocation7 [shape = 'u8[65536]{0}', space=vmem, size = 0x10000, scoped, tag = 'input window, operand 3, single buffered']
    #allocation8 [shape = 'u8[4096]{0}', space=vmem, size = 0x1000, scoped, tag = 'output window, operand 0, single buffered']
    %10 = vsyncpa [#allocation3], 0
    %11 = vsyncpa [#allocation6], 0
    %12 = vsyncpa [#allocation4], 0
    // Predicated region
    $region2: #{_autoencoder_pallas.1} parent=1 // pred_check
      _
    $region3: #{_autoencoder_pallas.1} parent=1 // pred_check_branch
      %14 = sbr.rel (0) target = $region5
    $region4: #{_autoencoder_pallas.1} parent=1 // pred_region
      %16 = vsyncadd [#allocation3], 0
      %s18 = sshll.u32 %s0, 4
      %s19 = int_to_ptr.hbm [resolvable:$true] %s18
      %s20 = sshll.u32 [#allocation2], 4
      %s21 = int_to_ptr.vmem [resolvable:$true] %s20
      %23 = dma.hbm_to_vmem [thread:$0]  %s19, 128, %s21, [#allocation3]
    $region5: #{_autoencoder_pallas.1} parent=1 // pred_fallthru
      _
    // Predicated region
    $region6: #{_autoencoder_pallas.1} parent=1 // pred_check
      _
    $region7: #{_autoencoder_pallas.1} parent=1 // pred_check_branch
      %25 = sbr.rel (0) target = $region9
    $region8: #{_autoencoder_pallas.1} parent=1 // pred_region
      %27 = vsyncadd [#allocation6], 0
      %s28 = sshll.u32 %s1, 4
      %s29 = int_to_ptr.hbm [resolvable:$true] %s28
      %s30 = sshll.u32 [#allocation5], 4
      %s31 = int_to_ptr.vmem [resolvable:$true] %s30
      %36 = dma.hbm_to_vmem [thread:$0]  %s29, 2048, %s31, [#allocation6], 128, 128, 8
    $region9: #{_autoencoder_pallas.1} parent=1 // pred_fallthru
      _
    // Predicated region
    $region10: #{_autoencoder_pallas.1} parent=1 // pred_check
      _
    $region11: #{_autoencoder_pallas.1} parent=1 // pred_check_branch
      %38 = sbr.rel (0) target = $region13
    $region12: #{_autoencoder_pallas.1} parent=1 // pred_region
      _
    $region13: #{_autoencoder_pallas.1} parent=1 // pred_fallthru
      _
    // Predicated region
    $region14: #{_autoencoder_pallas.1} parent=1 // pred_check
      _
    $region15: #{_autoencoder_pallas.1} parent=1 // pred_check_branch
      %40 = sbr.rel (0) target = $region17
    $region16: #{_autoencoder_pallas.1} parent=1 // pred_region
      %42 = vsyncadd [#allocation6], 0
      %s43 = sshll.u32 %s3, 4
      %s44 = int_to_ptr.hbm [resolvable:$true] %s43
      %s45 = sshll.u32 [#allocation7], 4
      %s46 = int_to_ptr.vmem [resolvable:$true] %s45
      %51 = dma.hbm_to_vmem [thread:$0]  %s44, 2048, %s46, [#allocation6], 128, 128, 8
    $region17: #{_autoencoder_pallas.1} parent=1 // pred_fallthru
      _
    // Predicated region
    $region18: #{_autoencoder_pallas.1} parent=1 // pred_check
      _
    $region19: #{_autoencoder_pallas.1} parent=1 // pred_check_branch
      %53 = sbr.rel (0) target = $region21
    $region20: #{_autoencoder_pallas.1} parent=1 // pred_region
      _
    $region21: #{_autoencoder_pallas.1} parent=1 // pred_fallthru
      _
    // Predicated region
    $region22: #{_autoencoder_pallas.1} parent=1 // pred_check
      _
    $region23: #{_autoencoder_pallas.1} parent=1 // pred_check_branch
      %55 = sbr.rel (0) target = $region25
    $region24: #{_autoencoder_pallas.1} parent=1 // pred_region
      %57 = dma.done [#allocation3], 128
    $region25: #{_autoencoder_pallas.1} parent=1 // pred_fallthru
      _
    // Predicated region
    $region26: #{_autoencoder_pallas.1} parent=1 // pred_check
      _
    $region27: #{_autoencoder_pallas.1} parent=1 // pred_check_branch
      %59 = sbr.rel (0) target = $region29
    $region28: #{_autoencoder_pallas.1} parent=1 // pred_region
      %61 = dma.done [#allocation6], 2048
    $region29: #{_autoencoder_pallas.1} parent=1 // pred_fallthru
      _
    // Predicated region
    $region30: #{_autoencoder_pallas.1} parent=1 // pred_check
      _
    $region31: #{_autoencoder_pallas.1} parent=1 // pred_check_branch
      %63 = sbr.rel (0) target = $region33
    $region32: #{_autoencoder_pallas.1} parent=1 // pred_region
      %65 = dma.done [#allocation6], 2048
    $region33: #{_autoencoder_pallas.1} parent=1 // pred_fallthru
      _
    %v66 = vld [vmem:[#allocation2] sm:$0xff]
    %v67 = vld [vmem:[#allocation5] sm:$0xff]
    %v68 = vld [vmem:[#allocation5 + $0x8] sm:$0xff]
    %v69 = vld [vmem:[#allocation5 + $0x10] sm:$0xff]
    %v70 = vld [vmem:[#allocation5 + $0x18] sm:$0xff]
    %v71 = vld [vmem:[#allocation5 + $0x20] sm:$0xff]
    %v72 = vld [vmem:[#allocation5 + $0x28] sm:$0xff]
    %v73 = vld [vmem:[#allocation5 + $0x30] sm:$0xff]
    %v74 = vld [vmem:[#allocation5 + $0x38] sm:$0xff]
    %v75 = vld [vmem:[#allocation5 + $0x40] sm:$0xff]
    %v76 = vld [vmem:[#allocation5 + $0x48] sm:$0xff]
    %v77 = vld [vmem:[#allocation5 + $0x50] sm:$0xff]
    %v78 = vld [vmem:[#allocation5 + $0x58] sm:$0xff]
    %v79 = vld [vmem:[#allocation5 + $0x60] sm:$0xff]
    %v80 = vld [vmem:[#allocation5 + $0x68] sm:$0xff]
    %v81 = vld [vmem:[#allocation5 + $0x70] sm:$0xff]
    %v82 = vld [vmem:[#allocation5 + $0x78] sm:$0xff]
    %v83 = vld [vmem:[%s2] sm:$0x1]
    %v85 = vperm.slane %v83, 0
    %87 = vmatpush.msra.mxu0 %v82
    %88 = vmatpush.msra.mxu0 %v81
    %89 = vmatpush.msra.mxu0 %v80
    %90 = vmatpush.msra.mxu0 %v79
    %91 = vmatpush.msra.mxu0 %v78
    %92 = vmatpush.msra.mxu0 %v77
    %93 = vmatpush.msra.mxu0 %v76
    %94 = vmatpush.msra.mxu0 %v75
    %95 = vmatpush.msra.mxu0 %v74
    %96 = vmatpush.msra.mxu0 %v73
    %97 = vmatpush.msra.mxu0 %v72
    %98 = vmatpush.msra.mxu0 %v71
    %99 = vmatpush.msra.mxu0 %v70
    %100 = vmatpush.msra.mxu0 %v69
    %101 = vmatpush.msra.mxu0 %v68
    %102 = vmatpush.msra.mxu0 %v67
    %103 = vmatmul.f32.gmra.mxu0 %v66
    %v104 = vpop.f32.mrf.mxu0
    %v105 = vadd.f32 %v85, %v104
    %106 = vdwg.mxu0
    %v107 = vtanh.pop %v105
    %v108 = vld [vmem:[#allocation7] sm:$0xff]
    %v109 = vld [vmem:[#allocation7 + $0x8] sm:$0xff]
    %v110 = vld [vmem:[#allocation7 + $0x10] sm:$0xff]
    %v111 = vld [vmem:[#allocation7 + $0x18] sm:$0xff]
    %v112 = vld [vmem:[#allocation7 + $0x20] sm:$0xff]
    %v113 = vld [vmem:[#allocation7 + $0x28] sm:$0xff]
    %v114 = vld [vmem:[#allocation7 + $0x30] sm:$0xff]
    %v115 = vld [vmem:[#allocation7 + $0x38] sm:$0xff]
    %v116 = vld [vmem:[#allocation7 + $0x40] sm:$0xff]
    %v117 = vld [vmem:[#allocation7 + $0x48] sm:$0xff]
    %v118 = vld [vmem:[#allocation7 + $0x50] sm:$0xff]
    %v119 = vld [vmem:[#allocation7 + $0x58] sm:$0xff]
    %v120 = vld [vmem:[#allocation7 + $0x60] sm:$0xff]
    %v121 = vld [vmem:[#allocation7 + $0x68] sm:$0xff]
    %v122 = vld [vmem:[#allocation7 + $0x70] sm:$0xff]
    %v123 = vld [vmem:[#allocation7 + $0x78] sm:$0xff]
    %v124 = vld [vmem:[%s4] sm:$0x1]
    %v126 = vperm.slane %v124, 0
    %128 = vmatpush.msra.mxu0 %v123
    %129 = vmatpush.msra.mxu0 %v122
    %130 = vmatpush.msra.mxu0 %v121
    %131 = vmatpush.msra.mxu0 %v120
    %132 = vmatpush.msra.mxu0 %v119
    %133 = vmatpush.msra.mxu0 %v118
    %134 = vmatpush.msra.mxu0 %v117
    %135 = vmatpush.msra.mxu0 %v116
    %136 = vmatpush.msra.mxu0 %v115
    %137 = vmatpush.msra.mxu0 %v114
    %138 = vmatpush.msra.mxu0 %v113
    %139 = vmatpush.msra.mxu0 %v112
    %140 = vmatpush.msra.mxu0 %v111
    %141 = vmatpush.msra.mxu0 %v110
    %142 = vmatpush.msra.mxu0 %v109
    %143 = vmatpush.msra.mxu0 %v108
    %144 = vmatmul.f32.gmra.mxu0 %v107
    %v145 = vpop.f32.mrf.mxu0
    %v146 = vadd.f32 %v126, %v145
    %147 = vdwg.mxu0
    %v148 = vtanh.pop %v146
    %149 = vst [vmem:[#allocation8] sm:$0xff] %v148
    // Predicated region
    $region34: #{_autoencoder_pallas.1} parent=1 // pred_check
      _
    $region35: #{_autoencoder_pallas.1} parent=1 // pred_check_branch
      %151 = sbr.rel (0) target = $region37
    $region36: #{_autoencoder_pallas.1} parent=1 // pred_region
      %153 = vsyncadd [#allocation4], 0
      %s155 = sshll.u32 [#allocation8], 4
      %s156 = int_to_ptr.vmem [resolvable:$true] %s155
      %s157 = sshll.u32 %s5, 4
      %s158 = int_to_ptr.hbm [resolvable:$true] %s157
      %160 = dma.vmem_to_hbm [thread:$0]  %s156, 128, %s158, [#allocation4]
    $region37: #{_autoencoder_pallas.1} parent=1 // pred_fallthru
      _
    // Predicated region
    $region38: #{_autoencoder_pallas.1} parent=1 // pred_check
      _
    $region39: #{_autoencoder_pallas.1} parent=1 // pred_check_branch
      %162 = sbr.rel (0) target = $region41
    $region40: #{_autoencoder_pallas.1} parent=1 // pred_region
      %164 = dma.done [#allocation4], 128
    $region41: #{_autoencoder_pallas.1} parent=1 // pred_fallthru
      _
    %165 = vsyncpa [#allocation3], 1
    %166 = vsyncpa [#allocation6], 1
    %167 = vsyncpa [#allocation4], 1

</llo_original>
